<compile_context>
chip_gen: v6e
topology: v6e:2x2x1
jax: 0.10.0
libtpu: 0.0.40
codegen_flags: <defaults>
</compile_context>

<pallas_src>
import functools

import jax
import jax.numpy as jnp
from jax import lax
from jax.experimental import pallas as pl
from jax.experimental.pallas import tpu as pltpu


LANES = 128
_SPLIT_THRESHOLD_BYTES = 1 << 20  # above this, force >=2 tiles (v7x megacore)


def _tpu_block_budget_and_vmem_limit():
    """Per-input block budget (bytes) and optional vmem_limit_bytes, by TPU gen."""
    try:
        kind = jax.devices()[0].device_kind.lower()
    except Exception:  # pragma: no cover - defensive
        kind = ""
    if "v7" in kind:
        # 2 inputs x 2 buffers x 6 MiB = 24 MiB; raise scoped VMEM above default.
        return 6 * 1024 * 1024, 40 << 20
    if "v6" in kind:
        # 2 x 2 x 4 MiB = 16 MiB fits v6e's 32 MiB default scoped VMEM.
        return 4 * 1024 * 1024, None
    # v5e / unknown: 2 x 2 x 2 MiB = 8 MiB fits the 16 MiB default everywhere.
    return 2 * 1024 * 1024, None


def _mse_partial_kernel(x_ref, y_ref, out_ref, *, block_rows, total_rows,
                        num_tiles, out_rows):
    """Per-tile partial sum of (x - y)^2, reduced over rows to (out_rows, 128)."""
    d = x_ref[...].astype(jnp.float32) - y_ref[...].astype(jnp.float32)
    dd = d * d

    def _reduce(v):
        if out_rows == 8:
            # Split the sublane-major axis (layout-free reshape); sum over the
            # leading axis keeps everything on the VPU (no cross-sublane XLU).
            return jnp.sum(v.reshape(block_rows // 8, 8, LANES), axis=0)
        return jnp.sum(v, axis=0, keepdims=True)

    last = num_tiles - 1
    valid_last = total_rows - last * block_rows  # static Python int

    if valid_last == block_rows:
        # No partial tile anywhere: fully unmasked path on every step.
        out_ref[...] = _reduce(dd)
    else:
        @pl.when(pl.program_id(0) != last)
        def _():
            out_ref[...] = _reduce(dd)

        @pl.when(pl.program_id(0) == last)
        def _():
            # Only the final tile pays for the iota/compare/select.
            row_ids = lax.broadcasted_iota(jnp.int32, dd.shape, 0)
            out_ref[...] = _reduce(jnp.where(row_ids < valid_last, dd, 0.0))


def mse_loss_pallas(x, y):
    """mean((x - y)**2) over all elements, computed with a Pallas TPU kernel."""
    # TODO(synk): PyTorch nn.MSELoss broadcasting between input/target is not
    # supported here; shapes must match exactly.
    assert x.shape == y.shape, "MSELoss requires matching shapes (no broadcasting)"
    n_elems = x.size
    if n_elems == 0:
        return jnp.float32(0.0)

    xf = jnp.ravel(x)
    yf = jnp.ravel(y)

    n_main = (n_elems // LANES) * LANES
    tail = n_elems - n_main

    # <=127-element lane tail handled in plain JAX — no full-array pad/copy.
    if tail:
        tx = xf[n_main:].astype(jnp.float32)
        ty = yf[n_main:].astype(jnp.float32)
        tail_sum = jnp.sum((tx - ty) ** 2)
    else:
        tail_sum = jnp.float32(0.0)

    inv_n = jnp.float32(1.0 / n_elems)
    if n_main == 0:
        return tail_sum * inv_n

    rows = n_main // LANES
    x2d = (xf[:n_main] if tail else xf).reshape(rows, LANES)
    y2d = (yf[:n_main] if tail else yf).reshape(rows, LANES)

    itemsize = jnp.dtype(x.dtype).itemsize
    block_budget, vmem_limit = _tpu_block_budget_and_vmem_limit()
    max_rows = block_budget // (LANES * itemsize)
    max_rows = max(32, (max_rows // 32) * 32)  # multiple of 8/16/32 sublane mins

    bytes_per_input = rows * LANES * itemsize
    if rows <= max_rows and bytes_per_input <= _SPLIT_THRESHOLD_BYTES:
        # Tiny inputs: one block, no pipeline / grid-step overhead.
        block_rows = rows
        num_tiles = 1
    else:
        # At least 2 tiles so the "parallel" grid axis can span both v7x TCs.
        half_rows = pl.cdiv(rows, 2)
        half_rows = ((half_rows + 31) // 32) * 32
        block_rows = min(max_rows, half_rows)
        num_tiles = pl.cdiv(rows, block_rows)

    out_rows = 8 if (block_rows % 8 == 0) else 1

    kernel = functools.partial(
        _mse_partial_kernel,
        block_rows=block_rows,
        total_rows=rows,
        num_tiles=num_tiles,
        out_rows=out_rows,
    )

    compiler_kwargs = dict(dimension_semantics=("parallel",))
    if vmem_limit is not None:
        compiler_kwargs["vmem_limit_bytes"] = vmem_limit

    partials = pl.pallas_call(
        kernel,
        out_shape=jax.ShapeDtypeStruct((num_tiles * out_rows, LANES), jnp.float32),
        grid_spec=pltpu.PrefetchScalarGridSpec(
            num_scalar_prefetch=0,
            grid=(num_tiles,),
            in_specs=[
                pl.BlockSpec((block_rows, LANES), lambda i: (i, 0)),
                pl.BlockSpec((block_rows, LANES), lambda i: (i, 0)),
            ],
            out_specs=pl.BlockSpec((out_rows, LANES), lambda i: (i, 0)),
        ),
        compiler_params=pltpu.CompilerParams(**compiler_kwargs),
        cost_estimate=pl.CostEstimate(
            flops=3 * n_main,
            transcendentals=0,
            bytes_accessed=2 * n_main * itemsize
            + num_tiles * out_rows * LANES * 4,
        ),
    )(x2d, y2d)

    # Tiny final combine (num_tiles*out_rows x 128 values) + mean scale in JAX.
    return (jnp.sum(partials) + tail_sum) * inv_n


class MSELossPallas:
    """JAX/Pallas equivalent of the PyTorch MSELoss wrapper module."""

    def __init__(self, auxiliary_loss_weight=0.0):
        self.auxiliary_loss_weight = auxiliary_loss_weight

    def __call__(self, input, target):
        auxiliary_loss = None
        if isinstance(input, tuple):
            input, auxiliary_loss = input
        loss = mse_loss_pallas(input, target)
        if auxiliary_loss is None:
            return loss
        return loss + self.auxiliary_loss_weight * auxiliary_loss


if __name__ == "__main__":
    key = jax.random.PRNGKey(0)
    k1, k2, k3 = jax.random.split(key, 3)

    loss_mod = MSELossPallas(auxiliary_loss_weight=0.1)

    # Small NCHW-style prediction / target pair (single-block fast path).
    x = jax.random.normal(k1, (2, 4, 16, 16), dtype=jnp.float32)
    t = jax.random.normal(k2, (2, 4, 16, 16), dtype=jnp.float32)
    aux = jax.random.normal(k3, (), dtype=jnp.float32)

    loss_plain = loss_mod(x, t)          # plain (input, target) path
    loss_aux = loss_mod((x, aux), t)     # (input, auxiliary_loss) tuple path

    # Odd element count: exercises the JAX-side lane-tail path (no full pad).
    xs = jax.random.normal(k1, (3, 5, 41, 7), dtype=jnp.float32)
    ts = jax.random.normal(k2, (3, 5, 41, 7), dtype=jnp.float32)
    loss_tail = loss_mod(xs, ts)

    # Medium input: exercises the multi-tile path + last-tile row masking.
    xb = jax.random.normal(k1, (3, 8, 240, 97), dtype=jnp.float32)
    tb = jax.random.normal(k2, (3, 8, 240, 97), dtype=jnp.float32)
    loss_big = loss_mod(xb, tb)

    jax.block_until_ready((loss_plain, loss_aux, loss_tail, loss_big))

    # Reference checks against pure-JAX MSE.
    ref = jnp.mean((x - t) ** 2)
    ref_tail = jnp.mean((xs - ts) ** 2)
    ref_big = jnp.mean((xb - tb) ** 2)
    assert jnp.allclose(loss_plain, ref, rtol=1e-5, atol=1e-5)
    assert jnp.allclose(loss_aux, ref + 0.1 * aux, rtol=1e-5, atol=1e-5)
    assert jnp.allclose(loss_tail, ref_tail, rtol=1e-5, atol=1e-5)
    assert jnp.allclose(loss_big, ref_big, rtol=1e-5, atol=1e-5)

    print("KERNEL_OK")
</pallas_src>

<mosaic_0001>
module attributes {stable_mosaic.version = 11 : i64} {
  func.func @_mse_partial_kernel(%arg0: i32, %arg1: memref<16x128xf32, #tpu.memory_space<vmem>>, %arg2: memref<16x128xf32, #tpu.memory_space<vmem>>, %arg3: memref<8x128xf32, #tpu.memory_space<vmem>>) attributes {dimension_semantics = [#tpu.dimension_semantics<parallel>], iteration_bounds = array<i64: 1>, scalar_prefetch = 0 : i64, scratch_operands = 0 : i64, tpu.core_type = #tpu.core_type<tc>, window_params = [{transform_indices = @transform_0, window_bounds = array<i64: 16, 128>}, {transform_indices = @transform_1, window_bounds = array<i64: 16, 128>}, {transform_indices = @transform_2, window_bounds = array<i64: 8, 128>}]} {
    %c0 = arith.constant 0 : index
    %c0_0 = arith.constant 0 : index
    %0 = vector.load %arg1[%c0, %c0_0] : memref<16x128xf32, #tpu.memory_space<vmem>>, vector<16x128xf32>
    %c0_1 = arith.constant 0 : index
    %c0_2 = arith.constant 0 : index
    %1 = vector.load %arg2[%c0_1, %c0_2] : memref<16x128xf32, #tpu.memory_space<vmem>>, vector<16x128xf32>
    %2 = arith.subf %0, %1 : vector<16x128xf32>
    %3 = arith.mulf %2, %2 : vector<16x128xf32>
    %4 = vector.shape_cast %3 : vector<16x128xf32> to vector<2x8x128xf32>
    %cst = arith.constant dense<0.000000e+00> : vector<8x128xf32>
    %5 = vector.multi_reduction <add>, %4, %cst [0] : vector<2x8x128xf32> to vector<8x128xf32>
    %c0_3 = arith.constant 0 : index
    %c0_4 = arith.constant 0 : index
    %6 = vector.load %arg3[%c0_3, %c0_4] : memref<8x128xf32, #tpu.memory_space<vmem>>, vector<8x128xf32>
    tpu.vector_store %arg3[%c0_3, %c0_4], %5 {strides = array<i32>} : memref<8x128xf32, #tpu.memory_space<vmem>>, vector<8x128xf32>,
    return
  }
  func.func @transform_0(%arg0: i32) -> (i32, i32) {
    %c0_i32 = arith.constant 0 : i32
    %c0_i32_0 = arith.constant 0 : i32
    return %arg0, %c0_i32 : i32, i32
  }
  func.func @transform_1(%arg0: i32) -> (i32, i32) {
    %c0_i32 = arith.constant 0 : i32
    %c0_i32_0 = arith.constant 0 : i32
    return %arg0, %c0_i32 : i32, i32
  }
  func.func @transform_2(%arg0: i32) -> (i32, i32) {
    %c0_i32 = arith.constant 0 : i32
    %c0_i32_0 = arith.constant 0 : i32
    return %arg0, %c0_i32 : i32, i32
  }
}

</mosaic_0001>

<llo_original>
// kernel: tpu_custom_call.1
$region0: #{tpu_custom_call.1}
  #allocation0 [shape = 'u32[]', space=smem, size = 0x4, offset = 0x4, fixed_abs, tag = 'smem constant byte address 0x4 - core index']
  #allocation1 [shape = 'u32[144,128]{1,0:T(1,128)}', space=vmem, size = 0x12000, scoped, tag = 'internal scratch']
  %s0 = inlined_call_operand.hbm [shape: f32[16,128], index: 0, kind: input, shape index: {}]
  %s1 = inlined_call_operand.hbm [shape: f32[16,128], index: 1, kind: input, shape index: {}]
  %s2 = inlined_call_operand.hbm [shape: f32[8,128], index: 2, kind: output, shape index: {}]
  %s3 = sld [smem:[#allocation0]]
  $region26: #{tpu_custom_call.1} parent=0
    _
  %s5 = ssub.s32 1, %s3
  %s6 = scalar_select 0, %s5, %s3
  $region1: #{tpu_custom_call.1} parent=0
    #allocation2 [shape = 'u8[8192]{0}', space=vmem, size = 0x2000, scoped, tag = 'input window, operand 0, single buffered']
    #allocation3 [shape = 's32[1]{0}', space=sflag, size = 0x4, scoped, tag = 'scoped memory for tpu_custom_call.1']
    #allocation4 [shape = 's32[1]{0}', space=sflag, size = 0x4, scoped, tag = 'scoped memory for tpu_custom_call.1']
    #allocation5 [shape = 'u8[8192]{0}', space=vmem, size = 0x2000, scoped, tag = 'input window, operand 1, single buffered']
    #allocation6 [shape = 's32[1]{0}', space=sflag, size = 0x4, scoped, tag = 'scoped memory for tpu_custom_call.1']
    #allocation7 [shape = 'u8[4096]{0}', space=vmem, size = 0x1000, scoped, tag = 'output window, operand 0, single buffered']
    %7 = vsyncpa [#allocation3], 0
    %8 = vsyncpa [#allocation6], 0
    %9 = vsyncpa [#allocation4], 0
    // Predicated region
    $region2: #{tpu_custom_call.1} parent=1 // pred_check
      _
    $region3: #{tpu_custom_call.1} parent=1 // pred_check_branch
      %11 = sbr.rel (0) target = $region5
    $region4: #{tpu_custom_call.1} parent=1 // pred_region
      %s13 = ssub.s32 256, 256
      %14 = vsyncadd [#allocation3], %s13
      %s15 = sshll.u32 [#allocation2], 4
      %s16 = int_to_ptr.vmem [resolvable:$true] %s15
      %21 = dma.hbm_to_vmem [thread:$0]  %s0, 256, %s16, [#allocation3], 128, 128, 8
    $region5: #{tpu_custom_call.1} parent=1 // pred_fallthru
      _
    // Predicated region
    $region6: #{tpu_custom_call.1} parent=1 // pred_check
      _
    $region7: #{tpu_custom_call.1} parent=1 // pred_check_branch
      %23 = sbr.rel (0) target = $region9
    $region8: #{tpu_custom_call.1} parent=1 // pred_region
      %s25 = ssub.s32 256, 256
      %26 = vsyncadd [#allocation6], %s25
      %s27 = sshll.u32 [#allocation5], 4
      %s28 = int_to_ptr.vmem [resolvable:$true] %s27
      %33 = dma.hbm_to_vmem [thread:$0]  %s1, 256, %s28, [#allocation6], 128, 128, 8
    $region9: #{tpu_custom_call.1} parent=1 // pred_fallthru
      _
    // Predicated region
    $region10: #{tpu_custom_call.1} parent=1 // pred_check
      _
    $region11: #{tpu_custom_call.1} parent=1 // pred_check_branch
      %35 = sbr.rel (0) target = $region13
    $region12: #{tpu_custom_call.1} parent=1 // pred_region
      %36 = dma.done [#allocation3], 256
    $region13: #{tpu_custom_call.1} parent=1 // pred_fallthru
      _
    // Predicated region
    $region14: #{tpu_custom_call.1} parent=1 // pred_check
      _
    $region15: #{tpu_custom_call.1} parent=1 // pred_check_branch
      %38 = sbr.rel (0) target = $region17
    $region16: #{tpu_custom_call.1} parent=1 // pred_region
      %39 = dma.done [#allocation6], 256
    $region17: #{tpu_custom_call.1} parent=1 // pred_fallthru
      _
    %v40 = vld [vmem:[#allocation2] sm:$0xff]
    %v41 = vld [vmem:[#allocation2 + $0x8] sm:$0xff]
    %v42 = vld [vmem:[#allocation5] sm:$0xff]
    %v43 = vld [vmem:[#allocation5 + $0x8] sm:$0xff]
    %v44 = vsub.f32 %v40, %v42
    %v45 = vsub.f32 %v41, %v43
    %v46 = vmul.f32 %v44, %v44
    %v47 = vmul.f32 %v45, %v45
    %v48 = vadd.f32 %v46, %v47
    %49 = vst [vmem:[#allocation7] sm:$0xff] %v48
    // Predicated region
    $region18: #{tpu_custom_call.1} parent=1 // pred_check
      _
    $region19: #{tpu_custom_call.1} parent=1 // pred_check_branch
      %51 = sbr.rel (0) target = $region21
    $region20: #{tpu_custom_call.1} parent=1 // pred_region
      %s53 = ssub.s32 128, 128
      %54 = vsyncadd [#allocation4], %s53
      %s56 = sshll.u32 [#allocation7], 4
      %s57 = int_to_ptr.vmem [resolvable:$true] %s56
      %59 = dma.vmem_to_hbm [thread:$0]  %s57, 128, %s2, [#allocation4]
    $region21: #{tpu_custom_call.1} parent=1 // pred_fallthru
      _
    // Predicated region
    $region22: #{tpu_custom_call.1} parent=1 // pred_check
      _
    $region23: #{tpu_custom_call.1} parent=1 // pred_check_branch
      %61 = sbr.rel (0) target = $region25
    $region24: #{tpu_custom_call.1} parent=1 // pred_region
      %62 = dma.done [#allocation4], 128
    $region25: #{tpu_custom_call.1} parent=1 // pred_fallthru
      _
    %63 = vsyncpa [#allocation3], 1
    %64 = vsyncpa [#allocation6], 1
    %65 = vsyncpa [#allocation4], 1

</llo_original>
